<compile_context>
chip_gen: v7x
topology: tpu7x:2x2x1
jax: 0.10.0
libtpu: 0.0.40
codegen_flags: <defaults>
</compile_context>

<pallas_src>
import functools

import jax
import jax.numpy as jnp
from jax.experimental import pallas as pl
from jax.experimental.pallas import tpu as pltpu

LN_EPS = 1e-6


# ----------------------------------------------------------------------------- kernels
def _layernorm_f32(x_ref, gamma_ref, beta_ref, approx_recip):
    """c2nl LayerNorm in f32: gamma * (x - mean) / (std_unbiased + eps) + beta."""
    x = x_ref[...].astype(jnp.float32)
    d = x.shape[-1]
    mean = jnp.mean(x, axis=-1, keepdims=True)
    centered = x - mean
    # torch.std default is unbiased (ddof = 1).
    var_unbiased = jnp.sum(centered * centered, axis=-1, keepdims=True) * (1.0 / (d - 1))
    std = jnp.sqrt(var_unbiased)
    gamma = gamma_ref[...].astype(jnp.float32)
    beta = beta_ref[...].astype(jnp.float32)
    if approx_recip:
        # EUP reciprocal (separate bundle slot, keeps the VALU free).
        # NOTE: zero-padded rows have std == 0 -> large-but-finite inverse; those rows
        # are sliced off in the wrapper, so this is benign.
        inv = pl.reciprocal(std + LN_EPS, approx=True)
        return (gamma * centered) * inv + beta
    return (gamma * centered) / (std + LN_EPS) + beta


def _ffn_resident_kernel(x_ref, gamma_ref, beta_ref, w_ref, b_ref, o_ref, *, approx_recip):
    # Resident-W path: W^T (d_model, d_ff_p) stays in VMEM across all row tiles
    # (constant index_map -> fetched once per core). 1-D grid over row tiles.
    xn = _layernorm_f32(x_ref, gamma_ref, beta_ref, approx_recip).astype(w_ref.dtype)
    y = jnp.dot(xn, w_ref[...], preferred_element_type=jnp.float32)
    y = y + b_ref[...].astype(jnp.float32)
    o_ref[...] = jnp.maximum(y, 0.0).astype(o_ref.dtype)


def _ffn_streamed_kernel(x_ref, gamma_ref, beta_ref, w_ref, b_ref, o_ref, xn_ref,
                         *, approx_recip):
    # Streamed-W path (d_ff too large for residency): 2-D grid (row tiles, d_ff tiles).
    # LayerNorm is computed once per row tile (at j == 0) and cached in VMEM scratch that
    # persists across the sequential ("arbitrary") d_ff axis.
    @pl.when(pl.program_id(1) == 0)
    def _():
        xn_ref[...] = _layernorm_f32(x_ref, gamma_ref, beta_ref,
                                     approx_recip).astype(xn_ref.dtype)

    y = jnp.dot(xn_ref[...], w_ref[...], preferred_element_type=jnp.float32)
    y = y + b_ref[...].astype(jnp.float32)
    o_ref[...] = jnp.maximum(y, 0.0).astype(o_ref.dtype)


# ----------------------------------------------------------------------------- wrapper
def _round_up(n, m):
    return int(pl.cdiv(n, m)) * m


def _vmem_capacity_bytes():
    try:
        cap = int(getattr(pltpu.get_tpu_info(), "vmem_capacity_bytes", 0))
        if cap > 0:
            return cap
    except Exception:
        pass
    return 64 << 20  # conservative (v7x-sized) fallback


def cls_positionwise_ffn(x, gamma, beta, weight, bias, *,
                         tile_rows=None, tile_ff=None,
                         out_dtype=None, matmul_dtype=jnp.bfloat16,
                         approx_recip=True):
    """y = ReLU(Linear_{d_model->d_ff}(LayerNorm_{d_model}(x))).

    x: [B, L, d_model]; weight: PyTorch-style (d_ff, d_model); bias: (d_ff,).
    Returns [B, L, d_ff]. Pass matmul_dtype=jnp.float32, approx_recip=False for an
    exact-f32 fallback; out_dtype=jnp.bfloat16 to halve output HBM traffic.
    """
    B, L, d_model = x.shape
    d_ff = weight.shape[0]
    if out_dtype is None:
        out_dtype = x.dtype
    out_itemsize = jnp.dtype(out_dtype).itemsize
    w_itemsize = jnp.dtype(matmul_dtype).itemsize

    # ---- generation-dependent budgets (128 MiB VMEM on v5e/v6e, 64 MiB on v7x) ----
    vmem_cap = _vmem_capacity_bytes()
    vmem_budget = (vmem_cap * 3) // 4          # 96 MiB on v5e/v6e, 48 MiB on v7x
    big_vmem = vmem_cap >= (100 << 20)
    if tile_rows is None:
        tile_rows = 512 if big_vmem else 256
    if tile_ff is None:
        tile_ff = 2048 if big_vmem else 1024

    # ---- row tiling: minimal padding + >= 2 "parallel" tiles for v7x megacore ----
    rows = B * L
    rows8 = _round_up(rows, 8)
    n_row_tiles = max(1, int(pl.cdiv(rows8, tile_rows)))
    if rows8 >= 16 and n_row_tiles < 2:
        n_row_tiles = 2                        # keep both v7x TensorCores busy
    tm = _round_up(int(pl.cdiv(rows8, n_row_tiles)), 8)
    rows_p = n_row_tiles * tm                  # at most ~8 junk rows per tile

    x2d = x.reshape(rows, d_model)
    if rows_p != rows:
        x2d = jnp.pad(x2d, ((0, rows_p - rows), (0, 0)))

    gamma2d = gamma.reshape(1, d_model)
    beta2d = beta.reshape(1, d_model)

    # ---- resident vs. streamed W decision ----
    dff128 = _round_up(d_ff, 128)              # lane-dense, unmasked stores
    w_res_bytes = d_model * dff128 * w_itemsize
    x_tile_bytes = tm * d_model * x2d.dtype.itemsize
    o_res_bytes = tm * dff128 * out_itemsize
    # Conservatively count the W buffer twice (pipeliner may double-buffer it).
    resident_need = 2 * w_res_bytes + 2 * x_tile_bytes + 2 * o_res_bytes + (2 << 20)
    use_resident = resident_need <= vmem_budget

    kernel_kwargs = dict(approx_recip=approx_recip)

    if use_resident:
        dff_p = dff128
        w_t = weight.T.astype(matmul_dtype)                     # (d_model, d_ff)
        bias2d = bias.reshape(1, d_ff).astype(jnp.float32)
        if dff_p != d_ff:
            w_t = jnp.pad(w_t, ((0, 0), (0, dff_p - d_ff)))
            bias2d = jnp.pad(bias2d, ((0, 0), (0, dff_p - d_ff)))

        vmem_limit = int(min(max(resident_need, 16 << 20), vmem_budget))

        out2d = pl.pallas_call(
            functools.partial(_ffn_resident_kernel, **kernel_kwargs),
            out_shape=jax.ShapeDtypeStruct((rows_p, dff_p), out_dtype),
            grid_spec=pltpu.PrefetchScalarGridSpec(
                num_scalar_prefetch=0,
                grid=(n_row_tiles,),
                in_specs=[
                    pl.BlockSpec((tm, d_model), lambda i: (i, 0)),     # x row tile
                    pl.BlockSpec((1, d_model), lambda i: (0, 0)),      # gamma (resident)
                    pl.BlockSpec((1, d_model), lambda i: (0, 0)),      # beta  (resident)
                    pl.BlockSpec((d_model, dff_p), lambda i: (0, 0)),  # W^T resident (1 DMA)
                    pl.BlockSpec((1, dff_p), lambda i: (0, 0)),        # bias  (resident)
                ],
                out_specs=pl.BlockSpec((tm, dff_p), lambda i: (i, 0)),
            ),
            compiler_params=pltpu.CompilerParams(
                dimension_semantics=("parallel",),
                vmem_limit_bytes=vmem_limit,
            ),
        )(x2d, gamma2d, beta2d, w_t, bias2d)
    else:
        # Streamed weight path for very large d_ff.
        tn = _round_up(min(int(tile_ff), dff128), 128)
        dff_p = _round_up(d_ff, tn)
        w_t = weight.T.astype(matmul_dtype)
        bias2d = bias.reshape(1, d_ff).astype(jnp.float32)
        if dff_p != d_ff:
            w_t = jnp.pad(w_t, ((0, 0), (0, dff_p - d_ff)))
            bias2d = jnp.pad(bias2d, ((0, 0), (0, dff_p - d_ff)))

        w_blk_bytes = d_model * tn * w_itemsize
        o_blk_bytes = tm * tn * out_itemsize
        scr_bytes = tm * d_model * w_itemsize
        streamed_need = (2 * x_tile_bytes + 3 * w_blk_bytes + 2 * o_blk_bytes
                         + scr_bytes + (2 << 20))
        vmem_limit = int(min(max(streamed_need, 16 << 20), vmem_budget))

        # 3-deep pipelining on the streamed weight blocks hides HBM latency jitter.
        try:
            w_spec = pl.BlockSpec((d_model, tn), lambda i, j: (0, j),
                                  pipeline_mode=pl.Buffered(3))
        except TypeError:  # jax version without pipeline_mode kwarg
            w_spec = pl.BlockSpec((d_model, tn), lambda i, j: (0, j))

        grid = (rows_p // tm, dff_p // tn)
        out2d = pl.pallas_call(
            functools.partial(_ffn_streamed_kernel, **kernel_kwargs),
            out_shape=jax.ShapeDtypeStruct((rows_p, dff_p), out_dtype),
            grid_spec=pltpu.PrefetchScalarGridSpec(
                num_scalar_prefetch=0,
                grid=grid,
                in_specs=[
                    pl.BlockSpec((tm, d_model), lambda i, j: (i, 0)),  # x row tile
                    pl.BlockSpec((1, d_model), lambda i, j: (0, 0)),   # gamma
                    pl.BlockSpec((1, d_model), lambda i, j: (0, 0)),   # beta
                    w_spec,                                            # W^T column block
                    pl.BlockSpec((1, tn), lambda i, j: (0, j)),        # bias block
                ],
                out_specs=pl.BlockSpec((tm, tn), lambda i, j: (i, j)),
                scratch_shapes=[pltpu.VMEM((tm, d_model), matmul_dtype)],
            ),
            compiler_params=pltpu.CompilerParams(
                # d_ff axis MUST stay "arbitrary": xn scratch is written only at j == 0
                # and reused across the sequential j sweep (megacore on rows only).
                dimension_semantics=("parallel", "arbitrary"),
                vmem_limit_bytes=vmem_limit,
            ),
        )(x2d, gamma2d, beta2d, w_t, bias2d)

    return out2d[:rows, :d_ff].reshape(B, L, d_ff)


# ----------------------------------------------------------------------------- reference
def _reference(x, gamma, beta, weight, bias):
    x32 = x.astype(jnp.float32)
    mean = jnp.mean(x32, axis=-1, keepdims=True)
    c = x32 - mean
    var_unbiased = jnp.sum(c * c, axis=-1, keepdims=True) / (x.shape[-1] - 1)
    std = jnp.sqrt(var_unbiased)
    xn = gamma * c / (std + LN_EPS) + beta
    y = xn @ weight.T.astype(jnp.float32) + bias
    return jnp.maximum(y, 0.0).astype(x.dtype)


if __name__ == "__main__":
    # Small shapes consistent with the module: [batch, input_len, d_model] -> [batch, input_len, d_ff]
    B, L, d_model, d_ff = 2, 64, 32, 128

    key = jax.random.PRNGKey(0)
    kx, kw, kb = jax.random.split(key, 3)

    x = jax.random.normal(kx, (B, L, d_model), dtype=jnp.float32)

    # Deterministic synthetic params (shapes follow nn.Linear(d_model, d_ff), LayerNorm(d_model)).
    bound = 1.0 / (d_model ** 0.5)
    weight = jax.random.uniform(kw, (d_ff, d_model), minval=-bound, maxval=bound,
                                dtype=jnp.float32)
    bias = jax.random.uniform(kb, (d_ff,), minval=-bound, maxval=bound,
                              dtype=jnp.float32)
    gamma = jnp.ones((d_model,), dtype=jnp.float32)   # LayerNorm a_2
    beta = jnp.zeros((d_model,), dtype=jnp.float32)   # LayerNorm b_2

    out = cls_positionwise_ffn(x, gamma, beta, weight, bias)
    out = jax.block_until_ready(out)

    ref = _reference(x, gamma, beta, weight, bias)
    assert out.shape == (B, L, d_ff)
    # bf16 MXU inputs (f32 accumulation) + approx reciprocal => loosened tolerance vs f32 ref.
    assert jnp.allclose(out, ref, atol=2e-2, rtol=2e-2), \
        f"max abs diff {jnp.max(jnp.abs(out - ref))}"

    print("KERNEL_OK")
</pallas_src>

<mosaic_0001>
module attributes {stable_mosaic.version = 11 : i64} {
  func.func @_ffn_resident_kernel(%arg0: i32, %arg1: memref<64x32xf32, #tpu.memory_space<vmem>>, %arg2: memref<1x32xf32, #tpu.memory_space<vmem>>, %arg3: memref<1x32xf32, #tpu.memory_space<vmem>>, %arg4: memref<32x128xbf16, #tpu.memory_space<vmem>>, %arg5: memref<1x128xf32, #tpu.memory_space<vmem>>, %arg6: memref<64x128xf32, #tpu.memory_space<vmem>>) attributes {dimension_semantics = [#tpu.dimension_semantics<parallel>], iteration_bounds = array<i64: 2>, scalar_prefetch = 0 : i64, scratch_operands = 0 : i64, tpu.core_type = #tpu.core_type<tc>, window_params = [{transform_indices = @transform_0, window_bounds = array<i64: 64, 32>}, {pipeline_mode = #tpu.pipeline_mode<synchronous>, transform_indices = @transform_1, window_bounds = array<i64: 1, 32>}, {pipeline_mode = #tpu.pipeline_mode<synchronous>, transform_indices = @transform_2, window_bounds = array<i64: 1, 32>}, {pipeline_mode = #tpu.pipeline_mode<synchronous>, transform_indices = @transform_3, window_bounds = array<i64: 32, 128>}, {pipeline_mode = #tpu.pipeline_mode<synchronous>, transform_indices = @transform_4, window_bounds = array<i64: 1, 128>}, {transform_indices = @transform_5, window_bounds = array<i64: 64, 128>}]} {
    %c0 = arith.constant 0 : index
    %c0_0 = arith.constant 0 : index
    %0 = vector.load %arg1[%c0, %c0_0] : memref<64x32xf32, #tpu.memory_space<vmem>>, vector<64x32xf32>
    %cst = arith.constant dense<0.000000e+00> : vector<64xf32>
    %1 = vector.multi_reduction <add>, %0, %cst [1] : vector<64x32xf32> to vector<64xf32>
    %2 = vector.shape_cast %1 : vector<64xf32> to vector<64x1xf32>
    %cst_1 = arith.constant 3.200000e+01 : f32
    %3 = vector.broadcast %cst_1 : f32 to vector<64x1xf32>
    %4 = arith.divf %2, %3 : vector<64x1xf32>
    %5 = vector.broadcast %4 : vector<64x1xf32> to vector<64x32xf32>
    %6 = arith.subf %0, %5 : vector<64x32xf32>
    %7 = arith.mulf %6, %6 : vector<64x32xf32>
    %cst_2 = arith.constant dense<0.000000e+00> : vector<64xf32>
    %8 = vector.multi_reduction <add>, %7, %cst_2 [1] : vector<64x32xf32> to vector<64xf32>
    %9 = vector.shape_cast %8 : vector<64xf32> to vector<64x1xf32>
    %cst_3 = arith.constant 0.0322580636 : f32
    %10 = vector.broadcast %cst_3 : f32 to vector<64x1xf32>
    %11 = arith.mulf %9, %10 : vector<64x1xf32>
    %12 = math.sqrt %11 : vector<64x1xf32>
    %c0_4 = arith.constant 0 : index
    %c0_5 = arith.constant 0 : index
    %13 = vector.load %arg2[%c0_4, %c0_5] : memref<1x32xf32, #tpu.memory_space<vmem>>, vector<1x32xf32>
    %c0_6 = arith.constant 0 : index
    %c0_7 = arith.constant 0 : index
    %14 = vector.load %arg3[%c0_6, %c0_7] : memref<1x32xf32, #tpu.memory_space<vmem>>, vector<1x32xf32>
    %cst_8 = arith.constant 9.99999997E-7 : f32
    %15 = vector.broadcast %cst_8 : f32 to vector<64x1xf32>
    %16 = arith.addf %12, %15 : vector<64x1xf32>
    %17 = tpu.reciprocal %16 {approx = true} : vector<64x1xf32> -> vector<64x1xf32>
    %18 = vector.broadcast %13 : vector<1x32xf32> to vector<64x32xf32>
    %19 = arith.mulf %18, %6 : vector<64x32xf32>
    %20 = vector.broadcast %17 : vector<64x1xf32> to vector<64x32xf32>
    %21 = arith.mulf %19, %20 : vector<64x32xf32>
    %22 = vector.broadcast %14 : vector<1x32xf32> to vector<64x32xf32>
    %23 = arith.addf %21, %22 : vector<64x32xf32>
    %24 = arith.truncf %23 : vector<64x32xf32> to vector<64x32xbf16>
    %c0_9 = arith.constant 0 : index
    %c0_10 = arith.constant 0 : index
    %25 = vector.load %arg4[%c0_9, %c0_10] : memref<32x128xbf16, #tpu.memory_space<vmem>>, vector<32x128xbf16>
    %cst_11 = arith.constant dense<0.000000e+00> : vector<64x128xf32>
    %26 = tpu.matmul %24, %25, %cst_11 {dimension_numbers = #tpu.dot_dimension_numbers<[1], [0], [0], [1], [0, 0, 1, 1], [], []>} : vector<64x32xbf16>, vector<32x128xbf16>, vector<64x128xf32> -> vector<64x128xf32>
    %c0_12 = arith.constant 0 : index
    %c0_13 = arith.constant 0 : index
    %27 = vector.load %arg5[%c0_12, %c0_13] : memref<1x128xf32, #tpu.memory_space<vmem>>, vector<1x128xf32>
    %28 = vector.broadcast %27 : vector<1x128xf32> to vector<64x128xf32>
    %29 = arith.addf %26, %28 : vector<64x128xf32>
    %cst_14 = arith.constant 0.000000e+00 : f32
    %30 = vector.broadcast %cst_14 : f32 to vector<64x128xf32>
    %31 = arith.maximumf %29, %30 : vector<64x128xf32>
    %c0_15 = arith.constant 0 : index
    %c0_16 = arith.constant 0 : index
    %32 = vector.load %arg6[%c0_15, %c0_16] : memref<64x128xf32, #tpu.memory_space<vmem>>, vector<64x128xf32>
    tpu.vector_store %arg6[%c0_15, %c0_16], %31 {strides = array<i32>} : memref<64x128xf32, #tpu.memory_space<vmem>>, vector<64x128xf32>,
    return
  }
  func.func @transform_0(%arg0: i32) -> (i32, i32) {
    %c0_i32 = arith.constant 0 : i32
    %c0_i32_0 = arith.constant 0 : i32
    return %arg0, %c0_i32 : i32, i32
  }
  func.func @transform_1(%arg0: i32) -> (i32, i32) {
    %c0_i32 = arith.constant 0 : i32
    %c0_i32_0 = arith.constant 0 : i32
    %c0_i32_1 = arith.constant 0 : i32
    return %c0_i32, %c0_i32_0 : i32, i32
  }
  func.func @transform_2(%arg0: i32) -> (i32, i32) {
    %c0_i32 = arith.constant 0 : i32
    %c0_i32_0 = arith.constant 0 : i32
    %c0_i32_1 = arith.constant 0 : i32
    return %c0_i32, %c0_i32_0 : i32, i32
  }
  func.func @transform_3(%arg0: i32) -> (i32, i32) {
    %c0_i32 = arith.constant 0 : i32
    %c0_i32_0 = arith.constant 0 : i32
    %c0_i32_1 = arith.constant 0 : i32
    return %c0_i32, %c0_i32_0 : i32, i32
  }
  func.func @transform_4(%arg0: i32) -> (i32, i32) {
    %c0_i32 = arith.constant 0 : i32
    %c0_i32_0 = arith.constant 0 : i32
    %c0_i32_1 = arith.constant 0 : i32
    return %c0_i32, %c0_i32_0 : i32, i32
  }
  func.func @transform_5(%arg0: i32) -> (i32, i32) {
    %c0_i32 = arith.constant 0 : i32
    %c0_i32_0 = arith.constant 0 : i32
    return %arg0, %c0_i32 : i32, i32
  }
}

</mosaic_0001>

<llo_original>
// kernel: tpu_custom_call.1
$region0: #{tpu_custom_call.1}
  #allocation0 [shape = 'u32[]', space=smem, size = 0x4, offset = 0x4, fixed_abs, tag = 'smem constant byte address 0x4 - core index']
  #allocation1 [shape = 'u32[144,128]{1,0:T(1,128)}', space=vmem, size = 0x12000, scoped, tag = 'internal scratch']
  %s0 = inlined_call_operand.vmem [shape: f32[128,32], index: 0, kind: input, shape index: {}]
  %s1 = inlined_call_operand.vmem [shape: f32[1,32], index: 1, kind: input, shape index: {}]
  %s2 = inlined_call_operand.vmem [shape: f32[1,32], index: 2, kind: input, shape index: {}]
  %s3 = inlined_call_operand.vmem [shape: bf16[32,128], index: 3, kind: input, shape index: {}]
  %s4 = inlined_call_operand.vmem [shape: f32[1,128], index: 4, kind: input, shape index: {}]
  %s5 = inlined_call_operand.hbm [shape: f32[128,128], index: 5, kind: output, shape index: {}]
  %s6 = sld [smem:[#allocation0]]
  $region53: #{tpu_custom_call.1} parent=0
    _
  %s8 = ssub.s32 1, %s6
  %s9 = scalar_select 0, %s8, %s6
  $region1: #{tpu_custom_call.1} parent=0
    #allocation2 [shape = 'u8[65536]{0}', space=vmem, size = 0x10000, scoped, tag = 'output window, operand 0']
    #allocation3 [shape = 's32[2]{0}', space=sflag, size = 0x8, scoped, tag = 'scoped memory for tpu_custom_call.1']
    %10 = vsyncpa [#allocation3], 0
    %s11 = scalar_lea.sflag [#allocation3], 1
    %12 = vsyncpa %s11, 0
    loop: start=0, step=1, limit=4
    $region2: #{tpu_custom_call.1} parent=1 // loop_pre_header
      _
    $region3: #{tpu_custom_call.1} parent=1 // loop_header
      %s14 = sphi 0, %s18
      %p15 = scmp.ge.s32.totalorder %s14, 4
      %s24 = sphi 0, %s26
      %s27 = sphi 0, %s24
      %s28 = sphi 0, %s27
      %s44 = sphi 0, %s28
      %s48 = sphi 0, %s48
      %s50 = sphi 0, %s48
      %s51 = sphi 0, %s50
      %s65 = sphi 0, %s51
      %s69 = sphi 0, %s69
      %s71 = sphi 0, %s69
      %s72 = sphi 0, %s71
      %s86 = sphi 0, %s72
      %s90 = sphi 0, %s90
      %s92 = sphi 0, %s90
      %s93 = sphi 0, %s92
      %s107 = sphi 0, %s93
      %s111 = sphi 0, %s111
      %s113 = sphi 0, %s111
      %s114 = sphi 0, %s113
      %s128 = sphi 0, %s114
      %s134 = sphi 0, %s136
      %s137 = sphi 0, %s134
      %s138 = sphi 0, %s137
      %s154 = sphi 0, %s138
    $region4: #{tpu_custom_call.1} parent=1 // loop_header_branch
      %17 = sbr.rel (%p15) target = $region8
    $region5: #{tpu_custom_call.1} parent=1 // loop_body
      %s19 = ssub.s32 %s14, 1
      %s20 = ssub.s32 %s14, 2
      %s21 = sadd.s32 %s14, 1
      %s22 = ssub.s32 %s14, %s21
      %p23 = scmp.eq.s32.totalorder %s22, 0
      %s25 = sadd.s32 %s24, 1
      %s26 = scalar_select %p23, %s24, %s25
      %p29 = pneg %p23
      %p30 = scmp.eq.s32.totalorder %s14, 1
      %p31 = por %p29, %p30
      %p32 = scmp.ne.s32.totalorder %s24, %s27
      %p33 = scmp.eq.s32.totalorder %s14, 0
      %p34 = por %p32, %p33
      %p35 = scmp.ne.s32.totalorder %s24, %s27
      %p36 = scmp.eq.s32.totalorder %s19, 1
      %p37 = por %p35, %p36
      %p38 = scmp.ne.s32.totalorder %s27, %s28
      %p39 = scmp.eq.s32.totalorder %s19, 0
      %p40 = por %p38, %p39
      %p41 = scmp.ne.s32.totalorder %s27, %s28
      %p42 = scmp.eq.s32.totalorder %s20, 1
      %p43 = por %p41, %p42
      %p45 = scmp.ne.s32.totalorder %s28, %s44
      %p46 = scmp.eq.s32.totalorder %s20, 0
      %p47 = por %p45, %p46
      %s49 = sadd.s32 %s48, 1
      %p52 = scmp.eq.s32.totalorder %s14, 1
      %p53 = scmp.ne.s32.totalorder %s48, %s50
      %p54 = scmp.eq.s32.totalorder %s14, 0
      %p55 = por %p53, %p54
      %p56 = scmp.ne.s32.totalorder %s48, %s50
      %p57 = scmp.eq.s32.totalorder %s19, 1
      %p58 = por %p56, %p57
      %p59 = scmp.ne.s32.totalorder %s50, %s51
      %p60 = scmp.eq.s32.totalorder %s19, 0
      %p61 = por %p59, %p60
      %p62 = scmp.ne.s32.totalorder %s50, %s51
      %p63 = scmp.eq.s32.totalorder %s20, 1
      %p64 = por %p62, %p63
      %p66 = scmp.ne.s32.totalorder %s51, %s65
      %p67 = scmp.eq.s32.totalorder %s20, 0
      %p68 = por %p66, %p67
      %s70 = sadd.s32 %s69, 1
      %p73 = scmp.eq.s32.totalorder %s14, 1
      %p74 = scmp.ne.s32.totalorder %s69, %s71
      %p75 = scmp.eq.s32.totalorder %s14, 0
      %p76 = por %p74, %p75
      %p77 = scmp.ne.s32.totalorder %s69, %s71
      %p78 = scmp.eq.s32.totalorder %s19, 1
      %p79 = por %p77, %p78
      %p80 = scmp.ne.s32.totalorder %s71, %s72
      %p81 = scmp.eq.s32.totalorder %s19, 0
      %p82 = por %p80, %p81
      %p83 = scmp.ne.s32.totalorder %s71, %s72
      %p84 = scmp.eq.s32.totalorder %s20, 1
      %p85 = por %p83, %p84
      %p87 = scmp.ne.s32.totalorder %s72, %s86
      %p88 = scmp.eq.s32.totalorder %s20, 0
      %p89 = por %p87, %p88
      %s91 = sadd.s32 %s90, 1
      %p94 = scmp.eq.s32.totalorder %s14, 1
      %p95 = scmp.ne.s32.totalorder %s90, %s92
      %p96 = scmp.eq.s32.totalorder %s14, 0
      %p97 = por %p95, %p96
      %p98 = scmp.ne.s32.totalorder %s90, %s92
      %p99 = scmp.eq.s32.totalorder %s19, 1
      %p100 = por %p98, %p99
      %p101 = scmp.ne.s32.totalorder %s92, %s93
      %p102 = scmp.eq.s32.totalorder %s19, 0
      %p103 = por %p101, %p102
      %p104 = scmp.ne.s32.totalorder %s92, %s93
      %p105 = scmp.eq.s32.totalorder %s20, 1
      %p106 = por %p104, %p105
      %p108 = scmp.ne.s32.totalorder %s93, %s107
      %p109 = scmp.eq.s32.totalorder %s20, 0
      %p110 = por %p108, %p109
      %s112 = sadd.s32 %s111, 1
      %p115 = scmp.eq.s32.totalorder %s14, 1
      %p116 = scmp.ne.s32.totalorder %s111, %s113
      %p117 = scmp.eq.s32.totalorder %s14, 0
      %p118 = por %p116, %p117
      %p119 = scmp.ne.s32.totalorder %s111, %s113
      %p120 = scmp.eq.s32.totalorder %s19, 1
      %p121 = por %p119, %p120
      %p122 = scmp.ne.s32.totalorder %s113, %s114
      %p123 = scmp.eq.s32.totalorder %s19, 0
      %p124 = por %p122, %p123
      %p125 = scmp.ne.s32.totalorder %s113, %s114
      %p126 = scmp.eq.s32.totalorder %s20, 1
      %p127 = por %p125, %p126
      %p129 = scmp.ne.s32.totalorder %s114, %s128
      %p130 = scmp.eq.s32.totalorder %s20, 0
      %p131 = por %p129, %p130
      %s132 = ssub.s32 %s14, %s21
      %p133 = scmp.eq.s32.totalorder %s132, 0
      %s135 = sadd.s32 %s134, 1
      %s136 = scalar_select %p133, %s134, %s135
      %p139 = pneg %p133
      %p140 = scmp.eq.s32.totalorder %s14, 1
      %p141 = por %p139, %p140
      %p142 = scmp.ne.s32.totalorder %s134, %s137
      %p143 = scmp.eq.s32.totalorder %s14, 0
      %p144 = por %p142, %p143
      %p145 = scmp.ne.s32.totalorder %s134, %s137
      %p146 = scmp.eq.s32.totalorder %s19, 1
      %p147 = por %p145, %p146
      %p148 = scmp.ne.s32.totalorder %s137, %s138
      %p149 = scmp.eq.s32.totalorder %s19, 0
      %p150 = por %p148, %p149
      %p151 = scmp.ne.s32.totalorder %s137, %s138
      %p152 = scmp.eq.s32.totalorder %s20, 1
      %p153 = por %p151, %p152
      %p155 = scmp.ne.s32.totalorder %s138, %s154
      %p156 = scmp.eq.s32.totalorder %s20, 0
      %p157 = por %p155, %p156
      %p158 = scmp.le.s32.totalorder 1, %s14
      %p159 = scmp.lt.s32.totalorder %s14, 3
      %p160 = pnand %p158, %p159
      %p161 = pneg %p160
      // Predicated region
      $region9: #{tpu_custom_call.1} parent=5 // pred_check
        _
      $region10: #{tpu_custom_call.1} parent=5 // pred_check_branch
        %163 = sbr.rel (%p160) target = $region12
      $region11: #{tpu_custom_call.1} parent=5 // pred_region
        %s164 = ssub.s32 %s14, 1
        // Predicated region
        $region13: #{tpu_custom_call.1} parent=11 // pred_check
          %p165 = pneg %p61
        $region14: #{tpu_custom_call.1} parent=11 // pred_check_branch
          %167 = sbr.rel (%p165) target = $region16
        $region15: #{tpu_custom_call.1} parent=11 // pred_region
          _
        $region16: #{tpu_custom_call.1} parent=11 // pred_fallthru
          _
        // Predicated region
        $region17: #{tpu_custom_call.1} parent=11 // pred_check
          %p168 = pneg %p82
        $region18: #{tpu_custom_call.1} parent=11 // pred_check_branch
          %170 = sbr.rel (%p168) target = $region20
        $region19: #{tpu_custom_call.1} parent=11 // pred_region
          _
        $region20: #{tpu_custom_call.1} parent=11 // pred_fallthru
          _
        // Predicated region
        $region21: #{tpu_custom_call.1} parent=11 // pred_check
          %p171 = pneg %p103
        $region22: #{tpu_custom_call.1} parent=11 // pred_check_branch
          %173 = sbr.rel (%p171) target = $region24
        $region23: #{tpu_custom_call.1} parent=11 // pred_region
          _
        $region24: #{tpu_custom_call.1} parent=11 // pred_fallthru
          _
        // Predicated region
        $region25: #{tpu_custom_call.1} parent=11 // pred_check
          %p174 = pneg %p124
        $region26: #{tpu_custom_call.1} parent=11 // pred_check_branch
          %176 = sbr.rel (%p174) target = $region28
        $region27: #{tpu_custom_call.1} parent=11 // pred_region
          _
        $region28: #{tpu_custom_call.1} parent=11 // pred_fallthru
          _
      $region12: #{tpu_custom_call.1} parent=5 // pred_fallthru
        _
      %p177 = scmp.lt.s32.totalorder %s14, 2
      // Predicated region
      $region29: #{tpu_custom_call.1} parent=5 // pred_check
        %p178 = pneg %p177
      $region30: #{tpu_custom_call.1} parent=5 // pred_check_branch
        %180 = sbr.rel (%p178) target = $region32
      $region31: #{tpu_custom_call.1} parent=5 // pred_region
        // Predicated region
        $region33: #{tpu_custom_call.1} parent=31 // pred_check
          %p181 = pneg %p34
        $region34: #{tpu_custom_call.1} parent=31 // pred_check_branch
          %183 = sbr.rel (%p181) target = $region36
        $region35: #{tpu_custom_call.1} parent=31 // pred_region
          %s184 = smul.u32 8, %s14
          %p185 = scmp.lt.s32.totalorder %s184, 15
          %s186 = scalar_select %p185, %s184, 15
          %s187 = smul.addr %s186, 8
          %s188 = scalar_lea.vmem %s0, %s187
          %s189 = smul.u32 8, %s14
        $region36: #{tpu_custom_call.1} parent=31 // pred_fallthru
          _
      $region32: #{tpu_custom_call.1} parent=5 // pred_fallthru
        _
      %p190 = scmp.le.s32.totalorder 1, %s14
      %p191 = scmp.lt.s32.totalorder %s14, 3
      %p192 = pnand %p190, %p191
      %p193 = pneg %p192
      // Predicated region
      $region37: #{tpu_custom_call.1} parent=5 // pred_check
        _
      $region38: #{tpu_custom_call.1} parent=5 // pred_check_branch
        %195 = sbr.rel (%p192) target = $region40
      $region39: #{tpu_custom_call.1} parent=5 // pred_region
        %s196 = ssub.s32 %s14, 1
        %s197 = smul.u32 8, %s19
        %p198 = scmp.lt.s32.totalorder %s197, 15
        %s199 = scalar_select %p198, %s197, 15
        %s200 = smul.addr %s199, 8
        %s201 = scalar_lea.vmem %s0, %s200
        %p202 = pneg %p40
        %p203 = pneg %p37
        %p204 = pneg %p61
        %p205 = pneg %p58
        %p206 = pneg %p82
        %p207 = pneg %p79
        %p208 = pneg %p103
        %p209 = pneg %p100
        %p210 = pneg %p124
        %p211 = pneg %p121
        %p212 = pneg %p150
        %p213 = pneg %p147
        %s214 = sand.u32 %s137, 1
        %s215 = scalar_lea.sflag [#allocation3], %s214
        %s216 = sand.u32 %s137, 1
        %s217 = smul.addr %s216, 64
        %s218 = scalar_lea.vmem [#allocation2], %s217
        %s219 = smul.u32 8, %s19
        %p220 = scmp.lt.s32.totalorder %s219, 15
        %s221 = scalar_select %p220, %s219, 15
        %s222 = smul.addr %s221, 8
        %s223 = scalar_lea.vmem %s0, %s222
        %s224 = smul.u32 8, %s19
        %s225 = smul.u32 8, %s19
        %v227 = vld [vmem:[%s223] sm:$0xff]
        %v228 = vld [vmem:[%s223 + $0x8] sm:$0xff]
        %v229 = vld [vmem:[%s223 + $0x10] sm:$0xff]
        %v230 = vld [vmem:[%s223 + $0x18] sm:$0xff]
        %v231 = vld [vmem:[%s223 + $0x20] sm:$0xff]
        %v232 = vld [vmem:[%s223 + $0x28] sm:$0xff]
        %v233 = vld [vmem:[%s223 + $0x30] sm:$0xff]
        %v234 = vld [vmem:[%s223 + $0x38] sm:$0xff]
        %vm235 = vcmask 261120
        %v236 = vsel %vm235, %v227, 0.0
        %237 = vadd.xlane.f32.xlu0 %v236
        %v238 = vpop.xlane.xlu0 %237
        %v239 = vsel %vm235, %v228, 0.0
        %240 = vadd.xlane.f32.xlu0 %v239
        %v241 = vpop.xlane.xlu0 %240
        %v242 = vsel %vm235, %v229, 0.0
        %243 = vadd.xlane.f32.xlu0 %v242
        %v244 = vpop.xlane.xlu0 %243
        %v245 = vsel %vm235, %v230, 0.0
        %246 = vadd.xlane.f32.xlu0 %v245
        %v247 = vpop.xlane.xlu0 %246
        %v248 = vsel %vm235, %v231, 0.0
        %249 = vadd.xlane.f32.xlu0 %v248
        %v250 = vpop.xlane.xlu0 %249
        %v251 = vsel %vm235, %v232, 0.0
        %252 = vadd.xlane.f32.xlu0 %v251
        %v253 = vpop.xlane.xlu0 %252
        %v254 = vsel %vm235, %v233, 0.0
        %255 = vadd.xlane.f32.xlu0 %v254
        %v256 = vpop.xlane.xlu0 %255
        %v257 = vsel %vm235, %v234, 0.0
        %258 = vadd.xlane.f32.xlu0 %v257
        %v259 = vpop.xlane.xlu0 %258
        %v260 = vrcp.pop 32.0
        %v261 = vmul.f32 %v238, %v260
        %v262 = vmul.f32 %v241, %v260
        %v263 = vmul.f32 %v244, %v260
        %v264 = vmul.f32 %v247, %v260
        %v265 = vmul.f32 %v250, %v260
        %v266 = vmul.f32 %v253, %v260
        %v267 = vmul.f32 %v256, %v260
        %v268 = vmul.f32 %v259, %v260
        %v269 = vsub.f32 %v227, %v261
        %v270 = vsub.f32 %v228, %v262
        %v271 = vsub.f32 %v229, %v263
        %v272 = vsub.f32 %v230, %v264
        %v273 = vsub.f32 %v231, %v265
        %v274 = vsub.f32 %v232, %v266
        %v275 = vsub.f32 %v233, %v267
        %v276 = vsub.f32 %v234, %v268
        %v277 = vmul.f32 %v269, %v269
        %v278 = vmul.f32 %v270, %v270
        %v279 = vmul.f32 %v271, %v271
        %v280 = vmul.f32 %v272, %v272
        %v281 = vmul.f32 %v273, %v273
        %v282 = vmul.f32 %v274, %v274
        %v283 = vmul.f32 %v275, %v275
        %v284 = vmul.f32 %v276, %v276
        %v285 = vsel %vm235, %v277, 0.0
        %286 = vadd.xlane.f32.xlu0 %v285
        %v287 = vpop.xlane.xlu0 %286
        %v288 = vsel %vm235, %v278, 0.0
        %289 = vadd.xlane.f32.xlu0 %v288
        %v290 = vpop.xlane.xlu0 %289
        %v291 = vsel %vm235, %v279, 0.0
        %292 = vadd.xlane.f32.xlu0 %v291
        %v293 = vpop.xlane.xlu0 %292
        %v294 = vsel %vm235, %v280, 0.0
        %295 = vadd.xlane.f32.xlu0 %v294
        %v296 = vpop.xlane.xlu0 %295
        %v297 = vsel %vm235, %v281, 0.0
        %298 = vadd.xlane.f32.xlu0 %v297
        %v299 = vpop.xlane.xlu0 %298
        %v300 = vsel %vm235, %v282, 0.0
        %301 = vadd.xlane.f32.xlu0 %v300
        %v302 = vpop.xlane.xlu0 %301
        %v303 = vsel %vm235, %v283, 0.0
        %304 = vadd.xlane.f32.xlu0 %v303
        %v305 = vpop.xlane.xlu0 %304
        %v306 = vsel %vm235, %v284, 0.0
        %307 = vadd.xlane.f32.xlu0 %v306
        %v308 = vpop.xlane.xlu0 %307
        %v309 = vmul.f32 %v287, 0.032258064
        %v310 = vmul.f32 %v290, 0.032258064
        %v311 = vmul.f32 %v293, 0.032258064
        %v312 = vmul.f32 %v296, 0.032258064
        %v313 = vmul.f32 %v299, 0.032258064
        %v314 = vmul.f32 %v302, 0.032258064
        %v315 = vmul.f32 %v305, 0.032258064
        %v316 = vmul.f32 %v308, 0.032258064
        %v317 = vrsqrt.pop %v309
        %v318 = vmul.f32 %v309, %v317
        %vm319 = vcmp.eq.f32.partialorder %v309, inf
        %v320 = vsel %vm319, %v309, %v318
        %vm321 = vcmp.eq.f32.partialorder %v309, 0.0
        %v322 = vand.u32 %v309, 2147483648
        %v323 = vsel %vm321, %v322, %v320
        %v324 = vrsqrt.pop %v310
        %v325 = vmul.f32 %v310, %v324
        %vm326 = vcmp.eq.f32.partialorder %v310, inf
        %v327 = vsel %vm326, %v310, %v325
        %vm328 = vcmp.eq.f32.partialorder %v310, 0.0
        %v329 = vand.u32 %v310, 2147483648
        %v330 = vsel %vm328, %v329, %v327
        %v331 = vrsqrt.pop %v311
        %v332 = vmul.f32 %v311, %v331
        %vm333 = vcmp.eq.f32.partialorder %v311, inf
        %v334 = vsel %vm333, %v311, %v332
        %vm335 = vcmp.eq.f32.partialorder %v311, 0.0
        %v336 = vand.u32 %v311, 2147483648
        %v337 = vsel %vm335, %v336, %v334
        %v338 = vrsqrt.pop %v312
        %v339 = vmul.f32 %v312, %v338
        %vm340 = vcmp.eq.f32.partialorder %v312, inf
        %v341 = vsel %vm340, %v312, %v339
        %vm342 = vcmp.eq.f32.partialorder %v312, 0.0
        %v343 = vand.u32 %v312, 2147483648
        %v344 = vsel %vm342, %v343, %v341
        %v345 = vrsqrt.pop %v313
        %v346 = vmul.f32 %v313, %v345
        %vm347 = vcmp.eq.f32.partialorder %v313, inf
        %v348 = vsel %vm347, %v313, %v346
        %vm349 = vcmp.eq.f32.partialorder %v313, 0.0
        %v350 = vand.u32 %v313, 2147483648
        %v351 = vsel %vm349, %v350, %v348
        %v352 = vrsqrt.pop %v314
        %v353 = vmul.f32 %v314, %v352
        %vm354 = vcmp.eq.f32.partialorder %v314, inf
        %v355 = vsel %vm354, %v314, %v353
        %vm356 = vcmp.eq.f32.partialorder %v314, 0.0
        %v357 = vand.u32 %v314, 2147483648
        %v358 = vsel %vm356, %v357, %v355
        %v359 = vrsqrt.pop %v315
        %v360 = vmul.f32 %v315, %v359
        %vm361 = vcmp.eq.f32.partialorder %v315, inf
        %v362 = vsel %vm361, %v315, %v360
        %vm363 = vcmp.eq.f32.partialorder %v315, 0.0
        %v364 = vand.u32 %v315, 2147483648
        %v365 = vsel %vm363, %v364, %v362
        %v366 = vrsqrt.pop %v316
        %v367 = vmul.f32 %v316, %v366
        %vm368 = vcmp.eq.f32.partialorder %v316, inf
        %v369 = vsel %vm368, %v316, %v367
        %vm370 = vcmp.eq.f32.partialorder %v316, 0.0
        %v371 = vand.u32 %v316, 2147483648
        %v372 = vsel %vm370, %v371, %v369
        %v373 = vld [vmem:[%s1] sm:$0x1]
        %v374 = vld [vmem:[%s2] sm:$0x1]
        %v375 = vadd.f32 %v323, 1e-06
        %v376 = vadd.f32 %v330, 1e-06
        %v377 = vadd.f32 %v337, 1e-06
        %v378 = vadd.f32 %v344, 1e-06
        %v379 = vadd.f32 %v351, 1e-06
        %v380 = vadd.f32 %v358, 1e-06
        %v381 = vadd.f32 %v365, 1e-06
        %v382 = vadd.f32 %v372, 1e-06
        %v383 = vrcp.pop %v375
        %v384 = vrcp.pop %v376
        %v385 = vrcp.pop %v377
        %v386 = vrcp.pop %v378
        %v387 = vrcp.pop %v379
        %v388 = vrcp.pop %v380
        %v389 = vrcp.pop %v381
        %v390 = vrcp.pop %v382
        %v392 = vlaneseq
        %v393 = vshrl.u32 %v392, 7
        %v394 = vsub.s32 0, %v393
        %v395 = vrot.slane %v373, %v394
        %v397 = vmul.f32 %v395, %v269
        %v398 = vmul.f32 %v395, %v270
        %v399 = vmul.f32 %v395, %v271
        %v400 = vmul.f32 %v395, %v272
        %v401 = vmul.f32 %v395, %v273
        %v402 = vmul.f32 %v395, %v274
        %v403 = vmul.f32 %v395, %v275
        %v404 = vmul.f32 %v395, %v276
        %v405 = vmul.f32 %v397, %v383
        %v406 = vmul.f32 %v398, %v384
        %v407 = vmul.f32 %v399, %v385
        %v408 = vmul.f32 %v400, %v386
        %v409 = vmul.f32 %v401, %v387
        %v410 = vmul.f32 %v402, %v388
        %v411 = vmul.f32 %v403, %v389
        %v412 = vmul.f32 %v404, %v390
        %v414 = vlaneseq
        %v415 = vshrl.u32 %v414, 7
        %v416 = vsub.s32 0, %v415
        %v417 = vrot.slane %v374, %v416
        %v419 = vadd.f32 %v405, %v417
        %v420 = vadd.f32 %v406, %v417
        %v421 = vadd.f32 %v407, %v417
        %v422 = vadd.f32 %v408, %v417
        %v423 = vadd.f32 %v409, %v417
        %v424 = vadd.f32 %v410, %v417
        %v425 = vadd.f32 %v411, %v417
        %v426 = vadd.f32 %v412, %v417
        %v427 = vpack.c.bf16 %v420, %v419
        %v428 = vpack.c.bf16 %v422, %v421
        %v429 = vpack.c.bf16 %v424, %v423
        %v430 = vpack.c.bf16 %v426, %v425
        %v431 = vld [vmem:[%s3] sm:$0xf]
        %v432 = vld [vmem:[%s3 + $0x4] sm:$0xf]
        %v433 = vld [vmem:[%s3 + $0x8] sm:$0xf]
        %v434 = vld [vmem:[%s3 + $0xc] sm:$0xf]
        %v435 = vld [vmem:[%s4] sm:$0x1]
        %v437 = vlaneseq
        %v438 = vshrl.u32 %v437, 7
        %v439 = vsub.s32 0, %v438
        %v440 = vrot.slane %v435, %v439
        %v446 = vunpack.c.l.b16 %v431
        %v447 = vunpack.c.l.b16 %v432
        %v448 = vunpack.c.l.b16 %v433
        %v449 = vunpack.c.l.b16 %v434
        %v450 = vpack.c.b16 %v447, %v446
        %v451 = vpack.c.b16 %v449, %v448
        %v455 = vsel %vm235, %v427, 0
        %v458 = vsel %vm235, %v428, 0
        %v461 = vsel %vm235, %v429, 0
        %v464 = vsel %vm235, %v430, 0
        %466 = vmatprep.subr.bf16.mxu0 0
        %467 = vmatpush1.bf16.msra.mxu0 %v450
        %468 = vmatprep.subr.bf16.mxu0 0
        %469 = vmatpush1.bf16.msra.mxu0 %v451
        %470 = vmatprep.subr.bf16.mxu0 0
        %471 = vmatpush1.bf16.msra.mxu0 0
        %472 = vmatprep.subr.bf16.mxu0 0
        %473 = vmatpush1.bf16.msra.mxu0 0
        %474 = vmatprep.subr.bf16.mxu0 0
        %475 = vmatpush1.bf16.msra.mxu0 0
        %476 = vmatprep.subr.bf16.mxu0 0
        %477 = vmatpush1.bf16.msra.mxu0 0
        %478 = vmatprep.subr.bf16.mxu0 0
        %479 = vmatpush1.bf16.msra.mxu0 0
        %480 = vmatprep.subr.bf16.mxu0 0
        %481 = vmatpush1.bf16.msra.mxu0 0
        %482 = vmatprep.subr.bf16.mxu0 0
        %483 = vmatpush1.bf16.msra.mxu0 0
        %484 = vmatprep.subr.bf16.mxu0 0
        %485 = vmatpush1.bf16.msra.mxu0 0
        %486 = vmatprep.subr.bf16.mxu0 0
        %487 = vmatpush1.bf16.msra.mxu0 0
        %488 = vmatprep.subr.bf16.mxu0 0
        %489 = vmatpush1.bf16.msra.mxu0 0
        %490 = vmatprep.subr.bf16.mxu0 0
        %491 = vmatpush1.bf16.msra.mxu0 0
        %492 = vmatprep.subr.bf16.mxu0 0
        %493 = vmatpush1.bf16.msra.mxu0 0
        %494 = vmatprep.subr.bf16.mxu0 0
        %495 = vmatpush1.bf16.msra.mxu0 0
        %496 = vmatprep.subr.bf16.mxu0 0
        %497 = vmatpush1.bf16.msra.mxu0 0
        %498 = vmatprep.mubr.bf16.mxu0 0
        %499 = vmatmul.mubr.bf16.gmra.mrb[0].mxu0 %v455
        %v500 = vpop.f32.mrb[0].mxu0
        %v501 = vadd.f32 %v440, %v500
        %v502 = vpop.f32.mrb[0].mxu0
        %v503 = vpop.f32.mrb[0].mxu0
        %v504 = vadd.f32 %v440, %v503
        %v505 = vpop.f32.mrb[0].mxu0
        %506 = vmatprep.mubr.bf16.mxu0 0
        %507 = vmatmul.mubr.bf16.gmra.mrb[0].mxu0 %v458
        %v508 = vpop.f32.mrb[0].mxu0
        %v509 = vadd.f32 %v440, %v508
        %v510 = vpop.f32.mrb[0].mxu0
        %v511 = vpop.f32.mrb[0].mxu0
        %v512 = vadd.f32 %v440, %v511
        %v513 = vpop.f32.mrb[0].mxu0
        %514 = vmatprep.mubr.bf16.mxu0 0
        %515 = vmatmul.mubr.bf16.gmra.mrb[0].mxu0 %v461
        %v516 = vpop.f32.mrb[0].mxu0
        %v517 = vadd.f32 %v440, %v516
        %v518 = vpop.f32.mrb[0].mxu0
        %v519 = vpop.f32.mrb[0].mxu0
        %v520 = vadd.f32 %v440, %v519
        %v521 = vpop.f32.mrb[0].mxu0
        %522 = vmatprep.mubr.bf16.mxu0 0
        %523 = vmatmul.mubr.bf16.gmra.mrb[0].mxu0 %v464
        %v524 = vpop.f32.mrb[0].mxu0
        %v525 = vadd.f32 %v440, %v524
        %v526 = vpop.f32.mrb[0].mxu0
        %v527 = vpop.f32.mrb[0].mxu0
        %v528 = vadd.f32 %v440, %v527
        %v529 = vpop.f32.mrb[0].mxu0
        %530 = vdwg.mxu0
        %v531 = vmax.f32 %v501, 0.0
        %v532 = vmax.f32 %v504, 0.0
        %v533 = vmax.f32 %v509, 0.0
        %v534 = vmax.f32 %v512, 0.0
        %v535 = vmax.f32 %v517, 0.0
        %v536 = vmax.f32 %v520, 0.0
        %v537 = vmax.f32 %v525, 0.0
        %v538 = vmax.f32 %v528, 0.0
        %539 = vst [vmem:[%s218] sm:$0xff] %v531
        %540 = vst [vmem:[%s218 + $0x8] sm:$0xff] %v532
        %541 = vst [vmem:[%s218 + $0x10] sm:$0xff] %v533
        %542 = vst [vmem:[%s218 + $0x18] sm:$0xff] %v534
        %543 = vst [vmem:[%s218 + $0x20] sm:$0xff] %v535
        %544 = vst [vmem:[%s218 + $0x28] sm:$0xff] %v536
        %545 = vst [vmem:[%s218 + $0x30] sm:$0xff] %v537
        %546 = vst [vmem:[%s218 + $0x38] sm:$0xff] %v538
        %s547 = sand.u32 %s137, 1
        %s548 = scalar_lea.sflag [#allocation3], %s547
        %s549 = sand.u32 %s137, 1
        %s550 = smul.addr %s549, 64
        %s551 = scalar_lea.vmem [#allocation2], %s550
        // Predicated region
        $region41: #{tpu_custom_call.1} parent=39 // pred_check
          %p552 = pneg %p147
        $region42: #{tpu_custom_call.1} parent=39 // pred_check_branch
          %554 = sbr.rel (%p552) target = $region44
        $region43: #{tpu_custom_call.1} parent=39 // pred_region
          %s555 = smul.u32 8, %s19
          %s557 = ssub.s32 1024, 1024
          %558 = vsyncadd %s548, %s557
          %s559 = smul.addr %s555, 128
          %s560 = scalar_lea.hbm %s5, %s559
          %s561 = sshll.u32 %s551, 4
          %s562 = int_to_ptr.vmem [resolvable:$true] %s561
          %567 = dma.vmem_to_hbm [thread:$0]  %s562, 1024, %s560, %s548, 128, 128, 8
        $region44: #{tpu_custom_call.1} parent=39 // pred_fallthru
          _
      $region40: #{tpu_custom_call.1} parent=5 // pred_fallthru
        _
      %p568 = scmp.le.s32.totalorder 2, %s14
      // Predicated region
      $region45: #{tpu_custom_call.1} parent=5 // pred_check
        %p569 = pneg %p568
      $region46: #{tpu_custom_call.1} parent=5 // pred_check_branch
        %571 = sbr.rel (%p569) target = $region48
      $region47: #{tpu_custom_call.1} parent=5 // pred_region
        %s572 = ssub.s32 %s14, 2
        // Predicated region
        $region49: #{tpu_custom_call.1} parent=47 // pred_check
          %p573 = pneg %p153
        $region50: #{tpu_custom_call.1} parent=47 // pred_check_branch
          %575 = sbr.rel (%p573) target = $region52
        $region51: #{tpu_custom_call.1} parent=47 // pred_region
          %s576 = sand.u32 %s138, 1
          %s577 = scalar_lea.sflag [#allocation3], %s576
          %s578 = sand.u32 %s138, 1
          %s579 = smul.addr %s578, 64
          %s580 = scalar_lea.vmem [#allocation2], %s579
          %581 = dma.done %s577, 1024
        $region52: #{tpu_custom_call.1} parent=47 // pred_fallthru
          _
      $region48: #{tpu_custom_call.1} parent=5 // pred_fallthru
        _
    $region6: #{tpu_custom_call.1} parent=1 // loop_footer
      %s18 = sadd.s32 1, %s14
    $region7: #{tpu_custom_call.1} parent=1 // loop_footer_branch
      %13 = sbr.rel target = $region3
    $region8: #{tpu_custom_call.1} parent=1 // loop_exit
      _
    %582 = vsyncpa [#allocation3], 1
    %s583 = scalar_lea.sflag [#allocation3], 1
    %584 = vsyncpa %s583, 1

</llo_original>
